<compile_context>
chip_gen: v5e
topology: v5e:2x2
jax: 0.10.0
libtpu: 0.0.40
codegen_flags: <defaults>
</compile_context>

<pallas_src>
import math

import jax
import jax.numpy as jnp
from jax.experimental import pallas as pl
from jax.experimental.pallas import tpu as pltpu


def _make_pos_encoding(length: int, d_model: int) -> jnp.ndarray:
    """Deterministic parameter construction matching the PyTorch __init__."""
    i = jnp.arange(d_model, dtype=jnp.float32)
    even = (jnp.arange(d_model) % 2) == 0
    freqs = jnp.where(
        even,
        10000.0 ** (-i / d_model),
        -(10000.0 ** ((1.0 - i) / d_model)),
    )[:, None]                                              # (d_model, 1)
    phases = jnp.where(even, 0.0, math.pi / 2.0)[:, None]   # (d_model, 1)
    pos = jnp.tile(jnp.arange(length, dtype=jnp.float32)[None, :], (d_model, 1))
    return jnp.sin(pos * freqs + phases)                    # (d_model, length)


def _pos_encoder_kernel(x_ref, pe_ref, o_ref):
    # x_ref: (TB, TL), pe_ref: (1, TL) -> broadcast add over rows (pure VPU,
    # lane-dense loads/stores).
    o_ref[...] = (x_ref[...] + pe_ref[...]).astype(o_ref.dtype)


def _vmem_capacity_bytes() -> int:
    """Physical per-core VMEM; conservative (v7x = 64 MiB) fallback."""
    try:
        cap = getattr(pltpu.get_tpu_info(), "vmem_capacity_bytes", None)
        if cap:
            return int(cap)
    except Exception:
        pass
    return 64 * 1024 * 1024


def _tile_sizes(B: int, DL: int, itemsize: int, block_budget_bytes: int):
    # Sublane tile (batch rows): full extent when small (always legal),
    # otherwise an 8-aligned cap.
    TB = B if B <= 256 else 256

    # Lane tile (flattened d_model*length): sized from a VMEM byte budget so
    # the x/out blocks stay MiB-scale regardless of TB.  Must be a multiple of
    # 128 unless it equals the full extent.
    if DL <= 128:
        TL = DL
    else:
        budget_elems = block_budget_bytes // (TB * itemsize)
        if budget_elems >= DL:
            TL = DL
        else:
            TL = max(128, (budget_elems // 128) * 128)

    # Ensure mem-bound-sized problems span enough grid steps for dual-TC
    # sharding (v7x) and pipeline overlap, without shrinking tiles below the
    # ~1 MiB range where per-step overhead starts to matter.
    total_bytes = B * DL * itemsize
    if total_bytes >= 32 * 1024 * 1024:
        min_steps = 8
    elif total_bytes >= 2 * 1024 * 1024:
        min_steps = 2
    else:
        min_steps = 1
    nB = pl.cdiv(B, TB)
    if nB * pl.cdiv(DL, TL) < min_steps and DL > 128:
        target_nl = pl.cdiv(min_steps, nB)
        tl_target = max(128, pl.cdiv(pl.cdiv(DL, target_nl), 128) * 128)
        TL = min(TL, tl_target)          # multiple of 128 or == DL -> legal
    return TB, TL


def pos_encoder_forward(x: jnp.ndarray, pos_encoding: jnp.ndarray,
                        *, donate_x: bool = False) -> jnp.ndarray:
    """x: (B, d_model, length); pos_encoding: (d_model, length)."""
    B, D, L = x.shape
    assert pos_encoding.shape == (D, L)
    DL = D * L
    itemsize = jnp.dtype(x.dtype).itemsize

    # Flatten to a lane-dense 2D layout (free reshape: contiguous dims only).
    x2d = x.reshape(B, DL)
    pe2d = pos_encoding.astype(x.dtype).reshape(1, DL)

    # Chip-adaptive budgets: big tiles where VMEM is 128 MiB (v5e/v6e), more
    # conservative on 64 MiB parts (v7x), always leaving compiler headroom.
    vmem_cap = _vmem_capacity_bytes()
    if vmem_cap >= 100 * 1024 * 1024:
        block_budget, vmem_limit = 16 * 1024 * 1024, 96 * 1024 * 1024
    else:
        block_budget, vmem_limit = 8 * 1024 * 1024, 48 * 1024 * 1024

    TB, TL = _tile_sizes(B, DL, itemsize, block_budget)
    nB, nL = pl.cdiv(B, TB), pl.cdiv(DL, TL)

    out2d = pl.pallas_call(
        _pos_encoder_kernel,
        out_shape=jax.ShapeDtypeStruct((B, DL), x.dtype),
        grid_spec=pltpu.PrefetchScalarGridSpec(
            num_scalar_prefetch=0,
            # lane-blocks outer, batch-blocks inner -> pe block index constant
            # across the inner axis, so its DMA is skipped on revisits.
            grid=(nL, nB),
            in_specs=[
                pl.BlockSpec((TB, TL), lambda j, i: (i, j)),
                pl.BlockSpec((1, TL), lambda j, i: (0, j)),
            ],
            out_specs=pl.BlockSpec((TB, TL), lambda j, i: (i, j)),
        ),
        compiler_params=pltpu.CompilerParams(
            # Both axes independent -> shardable across TensorCores on v7x;
            # neutral on single-TC v5e/v6e.
            dimension_semantics=("parallel", "parallel"),
            vmem_limit_bytes=vmem_limit,
        ),
        cost_estimate=pl.CostEstimate(
            flops=B * DL,
            transcendentals=0,
            bytes_accessed=(2 * B * DL + DL) * itemsize,
        ),
        input_output_aliases=({0: 0} if donate_x else {}),
    )(x2d, pe2d)

    return out2d.reshape(B, D, L)


if __name__ == "__main__":
    # Small shapes consistent with the module: batch=2, d_model=32, length=16.
    B, D, L = 2, 32, 16
    key = jax.random.PRNGKey(0)
    x = jax.random.normal(key, (B, D, L), dtype=jnp.float32)

    pe = _make_pos_encoding(L, D)              # (d_model, length) frozen parameter
    out = pos_encoder_forward(x, pe)
    out = jax.block_until_ready(out)

    # Reference check (plain JAX) — same broadcast-add semantics as PyTorch.
    ref = x + pe[None, :, :]
    assert out.shape == (B, D, L)
    assert jnp.allclose(out, ref, atol=1e-6), "mismatch vs reference"

    print("KERNEL_OK")
</pallas_src>

<mosaic_0001>
module attributes {stable_mosaic.version = 11 : i64} {
  func.func @_pos_encoder_kernel(%arg0: i32, %arg1: i32, %arg2: memref<2x512xf32, #tpu.memory_space<vmem>>, %arg3: memref<1x512xf32, #tpu.memory_space<vmem>>, %arg4: memref<2x512xf32, #tpu.memory_space<vmem>>) attributes {dimension_semantics = [#tpu.dimension_semantics<parallel>, #tpu.dimension_semantics<parallel>], iteration_bounds = array<i64: 1, 1>, scalar_prefetch = 0 : i64, scratch_operands = 0 : i64, tpu.core_type = #tpu.core_type<tc>, window_params = [{transform_indices = @transform_0, window_bounds = array<i64: 2, 512>}, {transform_indices = @transform_1, window_bounds = array<i64: 1, 512>}, {transform_indices = @transform_2, window_bounds = array<i64: 2, 512>}]} {
    %c0 = arith.constant 0 : index
    %c0_0 = arith.constant 0 : index
    %0 = vector.load %arg2[%c0, %c0_0] : memref<2x512xf32, #tpu.memory_space<vmem>>, vector<2x512xf32>
    %c0_1 = arith.constant 0 : index
    %c0_2 = arith.constant 0 : index
    %1 = vector.load %arg3[%c0_1, %c0_2] : memref<1x512xf32, #tpu.memory_space<vmem>>, vector<1x512xf32>
    %2 = vector.broadcast %1 : vector<1x512xf32> to vector<2x512xf32>
    %3 = arith.addf %0, %2 : vector<2x512xf32>
    %c0_3 = arith.constant 0 : index
    %c0_4 = arith.constant 0 : index
    %4 = vector.load %arg4[%c0_3, %c0_4] : memref<2x512xf32, #tpu.memory_space<vmem>>, vector<2x512xf32>
    tpu.vector_store %arg4[%c0_3, %c0_4], %3 {strides = array<i32>} : memref<2x512xf32, #tpu.memory_space<vmem>>, vector<2x512xf32>,
    return
  }
  func.func @transform_0(%arg0: i32, %arg1: i32) -> (i32, i32) {
    %c0_i32 = arith.constant 0 : i32
    return %arg1, %arg0 : i32, i32
  }
  func.func @transform_1(%arg0: i32, %arg1: i32) -> (i32, i32) {
    %c0_i32 = arith.constant 0 : i32
    %c0_i32_0 = arith.constant 0 : i32
    return %c0_i32, %arg0 : i32, i32
  }
  func.func @transform_2(%arg0: i32, %arg1: i32) -> (i32, i32) {
    %c0_i32 = arith.constant 0 : i32
    return %arg1, %arg0 : i32, i32
  }
}

</mosaic_0001>

<llo_original>
// kernel: tpu_custom_call.1
$region0: #{tpu_custom_call.1}
  #allocation0 [shape = 'u32[]', space=smem, size = 0x4, offset = 0x4, fixed_abs, tag = 'smem constant byte address 0x4 - core index']
  #allocation1 [shape = 'u32[72,128]{1,0:T(1,128)}', space=vmem, size = 0x9000, scoped, tag = 'internal scratch']
  %s0 = inlined_call_operand.hbm [shape: f32[2,512], index: 0, kind: input, shape index: {}]
  %s1 = inlined_call_operand.hbm [shape: f32[1,512], index: 1, kind: input, shape index: {}]
  %s2 = inlined_call_operand.hbm [shape: f32[2,512], index: 2, kind: output, shape index: {}]
  %s3 = sld [smem:[#allocation0]]
  $region26: #{tpu_custom_call.1} parent=0
    _
  %s5 = ssub.s32 1, %s3
  %s6 = scalar_select 0, %s5, %s3
  $region1: #{tpu_custom_call.1} parent=0
    #allocation2 [shape = 'u8[4096]{0}', space=vmem, size = 0x1000, scoped, tag = 'input window, operand 0, single buffered']
    #allocation3 [shape = 's32[1]{0}', space=sflag, size = 0x4, scoped, tag = 'scoped memory for tpu_custom_call.1']
    #allocation4 [shape = 's32[1]{0}', space=sflag, size = 0x4, scoped, tag = 'scoped memory for tpu_custom_call.1']
    #allocation5 [shape = 'u8[2048]{0}', space=vmem, size = 0x800, scoped, tag = 'input window, operand 1, single buffered']
    #allocation6 [shape = 's32[1]{0}', space=sflag, size = 0x4, scoped, tag = 'scoped memory for tpu_custom_call.1']
    #allocation7 [shape = 'u8[4096]{0}', space=vmem, size = 0x1000, scoped, tag = 'output window, operand 0, single buffered']
    %7 = vsyncpa [#allocation3], 0
    %8 = vsyncpa [#allocation6], 0
    %9 = vsyncpa [#allocation4], 0
    // Predicated region
    $region2: #{tpu_custom_call.1} parent=1 // pred_check
      _
    $region3: #{tpu_custom_call.1} parent=1 // pred_check_branch
      %11 = sbr.rel (0) target = $region5
    $region4: #{tpu_custom_call.1} parent=1 // pred_region
      %13 = vsyncadd [#allocation3], 0
      %s15 = sshll.u32 %s0, 4
      %s16 = int_to_ptr.hbm [resolvable:$true] %s15
      %s17 = sshll.u32 [#allocation2], 4
      %s18 = int_to_ptr.vmem [resolvable:$true] %s17
      %20 = dma.hbm_to_vmem [thread:$0]  %s16, 128, %s18, [#allocation3]
    $region5: #{tpu_custom_call.1} parent=1 // pred_fallthru
      _
    // Predicated region
    $region6: #{tpu_custom_call.1} parent=1 // pred_check
      _
    $region7: #{tpu_custom_call.1} parent=1 // pred_check_branch
      %22 = sbr.rel (0) target = $region9
    $region8: #{tpu_custom_call.1} parent=1 // pred_region
      %24 = vsyncadd [#allocation6], 0
      %s26 = sshll.u32 %s1, 4
      %s27 = int_to_ptr.hbm [resolvable:$true] %s26
      %s28 = sshll.u32 [#allocation5], 4
      %s29 = int_to_ptr.vmem [resolvable:$true] %s28
      %31 = dma.hbm_to_vmem [thread:$0]  %s27, 64, %s29, [#allocation6]
    $region9: #{tpu_custom_call.1} parent=1 // pred_fallthru
      _
    // Predicated region
    $region10: #{tpu_custom_call.1} parent=1 // pred_check
      _
    $region11: #{tpu_custom_call.1} parent=1 // pred_check_branch
      %33 = sbr.rel (0) target = $region13
    $region12: #{tpu_custom_call.1} parent=1 // pred_region
      %35 = dma.done [#allocation3], 128
    $region13: #{tpu_custom_call.1} parent=1 // pred_fallthru
      _
    // Predicated region
    $region14: #{tpu_custom_call.1} parent=1 // pred_check
      _
    $region15: #{tpu_custom_call.1} parent=1 // pred_check_branch
      %37 = sbr.rel (0) target = $region17
    $region16: #{tpu_custom_call.1} parent=1 // pred_region
      %39 = dma.done [#allocation6], 64
    $region17: #{tpu_custom_call.1} parent=1 // pred_fallthru
      _
    %v40 = vld [vmem:[#allocation2] sm:$0xff]
    %v41 = vld [vmem:[#allocation5] sm:$0xf]
    %v43 = vperm.slane %v41, 0
    %v44 = vperm.slane %v41, 1
    %v45 = vperm.slane %v41, 2
    %v46 = vperm.slane %v41, 3
    %v47 = vrot.slane %v44, 6
    %v48 = vrot.slane %v45, 4
    %v49 = vrot.slane %v46, 2
    %vm50 = vcmask 1041408
    %v51 = vsel %vm50, %v43, %v47
    %vm52 = vcmask 1045508
    %v53 = vsel %vm52, %v48, %v49
    %vm54 = vcmask 1043456
    %v55 = vsel %vm54, %v51, %v53
    %v57 = vadd.f32 %v40, %v55
    %58 = vst [vmem:[#allocation7] sm:$0xff] %v57
    // Predicated region
    $region18: #{tpu_custom_call.1} parent=1 // pred_check
      _
    $region19: #{tpu_custom_call.1} parent=1 // pred_check_branch
      %60 = sbr.rel (0) target = $region21
    $region20: #{tpu_custom_call.1} parent=1 // pred_region
      %62 = vsyncadd [#allocation4], 0
      %s64 = sshll.u32 [#allocation7], 4
      %s65 = int_to_ptr.vmem [resolvable:$true] %s64
      %s66 = sshll.u32 %s2, 4
      %s67 = int_to_ptr.hbm [resolvable:$true] %s66
      %69 = dma.vmem_to_hbm [thread:$0]  %s65, 128, %s67, [#allocation4]
    $region21: #{tpu_custom_call.1} parent=1 // pred_fallthru
      _
    // Predicated region
    $region22: #{tpu_custom_call.1} parent=1 // pred_check
      _
    $region23: #{tpu_custom_call.1} parent=1 // pred_check_branch
      %71 = sbr.rel (0) target = $region25
    $region24: #{tpu_custom_call.1} parent=1 // pred_region
      %73 = dma.done [#allocation4], 128
    $region25: #{tpu_custom_call.1} parent=1 // pred_fallthru
      _
    %74 = vsyncpa [#allocation3], 1
    %75 = vsyncpa [#allocation6], 1
    %76 = vsyncpa [#allocation4], 1

</llo_original>
